<compile_context>
chip_gen: v6e
topology: v6e:2x2x1
jax: 0.10.0
libtpu: 0.0.40
codegen_flags: <defaults>
</compile_context>

<pallas_src>
import functools
import math

import jax
import jax.numpy as jnp
from jax.experimental import pallas as pl
from jax.experimental.pallas import tpu as pltpu

EPS = 1e-8


def _wal_kernel(x_ref, y_ref, acc_ref, *, tn, rows, steps_per_split,
                first_masked_block, acc_rows, hard_labels, needs_mask):
    step = pl.program_id(1)

    @pl.when(step == 0)
    def _init():
        acc_ref[...] = jnp.zeros_like(acc_ref)

    # Inputs arrive in native dtype; do the math in f32.
    x = x_ref[...].astype(jnp.float32)
    y = y_ref[...].astype(jnp.float32)

    if hard_labels:
        # Single-log path (valid only for y in {0, 1}): halves EUP pressure.
        pos = y >= 0.5
        lg = jnp.log(jnp.maximum(jnp.where(pos, x, 1.0 - x), EPS))
        loss = jnp.where(pos, lg, x * lg)
    else:
        los_pos = y * jnp.log(jnp.maximum(x, EPS))
        los_neg = (1.0 - y) * jnp.log(jnp.maximum(1.0 - x, EPS))
        loss = los_pos + x * los_neg  # neg_weight = 1 - (1 - x) = x

    def _contrib(l):
        if acc_rows == 8:
            # Row-group sum: pure full-vreg VALU adds, no per-step XLU reduce.
            return l.reshape(tn // 8, 8, l.shape[-1]).sum(axis=0)
        return l.sum(axis=0, keepdims=True)

    if not needs_mask:
        acc_ref[...] += _contrib(loss)[None]
    else:
        blk = pl.program_id(0) * steps_per_split + step

        @pl.when(blk < first_masked_block)
        def _unmasked():
            acc_ref[...] += _contrib(loss)[None]

        @pl.when(blk >= first_masked_block)
        def _masked():
            # Select AFTER the log chain (0 * -inf would be NaN).
            row_ids = blk * tn + jax.lax.broadcasted_iota(jnp.int32, loss.shape, 0)
            safe = jnp.where(row_ids < rows, loss, 0.0)
            acc_ref[...] += _contrib(safe)[None]


def _vmem_limit_bytes():
    cap = 128 * 1024 * 1024
    try:
        info = pltpu.get_tpu_info()
        cap = int(getattr(info, "vmem_capacity_bytes", cap))
    except Exception:
        cap = 64 * 1024 * 1024  # conservative (v7x per-TC)
    return int(min(cap * 3 // 4, 96 * 1024 * 1024))


def _choose_row_tile(rows, c_pack, itemsize, row_tile):
    if row_tile is not None:
        tn = max(1, min(int(row_tile), rows))
    else:
        # ~2 MiB per input per pipeline buffer (2 inputs x 2 buffers ~= 8 MiB),
        # capped at 4096 rows; amortizes the ~0.35 us per-grid-step overhead.
        tn = (2 * 1024 * 1024) // max(1, c_pack * itemsize)
        tn = max(8, min(4096, tn))
    if tn >= rows:
        return rows
    return max(8, (tn // 8) * 8)


def weighted_asymmetric_loss(x, y, weight=None, *, row_tile=None, hard_labels=False):
    """x, y: (N, C) arrays (any float dtype); weight: (C,) or None. Returns f32 scalar."""
    N, C = x.shape
    if weight is None:
        w = jnp.ones((C,), dtype=jnp.float32)
    else:
        w = weight.astype(jnp.float32)

    # --- Lane-dense packing: (N, C) -> (rows, L), L = lcm(C, 128) (<= 512). ---
    c_pack, rows = C, N
    x2, y2, w_packed = x, y, w
    if C % 128 != 0:
        L = (C * 128) // math.gcd(C, 128)
        if L <= 512 and (N * C) % L == 0:
            c_pack = L
            rows = (N * C) // L
            x2 = x.reshape(rows, c_pack)
            y2 = y.reshape(rows, c_pack)
            w_packed = jnp.tile(w, L // C)  # packed column j -> class j % C

    itemsize = max(jnp.dtype(x2.dtype).itemsize, jnp.dtype(y2.dtype).itemsize)
    tn = _choose_row_tile(rows, c_pack, itemsize, row_tile)
    num_blocks = pl.cdiv(rows, tn)

    # Dual-TensorCore split: leading "parallel" axis (sharded across TCs on v7x).
    num_splits = 2 if num_blocks >= 2 else 1
    steps_per_split = pl.cdiv(num_blocks, num_splits)

    needs_mask = (rows % tn != 0) or (num_splits * steps_per_split != num_blocks)
    first_masked_block = (rows // tn) if rows % tn != 0 else num_blocks
    acc_rows = 8 if (c_pack % 128 == 0 and tn % 8 == 0 and tn >= 8) else 1
    last_blk = num_blocks - 1

    def _in_map(c, i):
        # Clamp phantom blocks (when num_blocks doesn't split evenly) onto the
        # last real block; their contribution is fully masked in the kernel.
        return (jnp.minimum(c * steps_per_split + i, last_blk), 0)

    kernel = functools.partial(
        _wal_kernel,
        tn=tn,
        rows=rows,
        steps_per_split=steps_per_split,
        first_masked_block=first_masked_block,
        acc_rows=acc_rows,
        hard_labels=bool(hard_labels),
        needs_mask=needs_mask,
    )

    partials = pl.pallas_call(
        kernel,
        out_shape=jax.ShapeDtypeStruct((num_splits, acc_rows, c_pack), jnp.float32),
        grid_spec=pltpu.PrefetchScalarGridSpec(
            num_scalar_prefetch=0,
            grid=(num_splits, steps_per_split),
            in_specs=[
                pl.BlockSpec((tn, c_pack), _in_map),
                pl.BlockSpec((tn, c_pack), _in_map),
            ],
            out_specs=pl.BlockSpec((1, acc_rows, c_pack), lambda c, i: (c, 0, 0)),
        ),
        compiler_params=pltpu.CompilerParams(
            dimension_semantics=("parallel", "arbitrary"),
            vmem_limit_bytes=_vmem_limit_bytes(),
        ),
    )(x2, y2)

    # Tiny epilogue in the wrapper: per-class weighting + final mean + negate.
    per_class = partials.sum(axis=(0, 1))  # (c_pack,) f32
    return -(per_class * w_packed).sum() / jnp.float32(N * C)


def _reference(x, y, weight):
    x = x.astype(jnp.float32)
    y = y.astype(jnp.float32)
    xs_pos = x
    xs_neg = 1.0 - x
    los_pos = y * jnp.log(jnp.maximum(xs_pos, EPS))
    los_neg = (1.0 - y) * jnp.log(jnp.maximum(xs_neg, EPS))
    neg_weight = 1.0 - xs_neg
    loss = los_pos + neg_weight * los_neg
    loss = loss * weight.reshape(1, -1).astype(jnp.float32)
    loss = loss.mean(axis=-1)
    return -loss.mean()


if __name__ == "__main__":
    key = jax.random.PRNGKey(0)
    kx, ky, kx2, ky2, kx3, ky3 = jax.random.split(key, 6)

    # --- Test 1: small shape, lane-packed path (C=32 -> c_pack=128, 1 block) ---
    N, C = 8, 32
    x = jax.nn.sigmoid(jax.random.normal(kx, (N, C), dtype=jnp.float32))
    y = (jax.random.uniform(ky, (N, C)) > 0.5).astype(jnp.float32)
    weight = jnp.linspace(0.5, 1.5, C, dtype=jnp.float32)

    out = jax.block_until_ready(weighted_asymmetric_loss(x, y, weight))
    ref = _reference(x, y, weight)
    assert jnp.allclose(out, ref, rtol=1e-5, atol=1e-6), (out, ref)

    # --- Test 2: bf16, unpacked C=48, multi-step + 2-way split + masked tail ---
    N2, C2 = 36, 48  # 36*48 not divisible by lcm(48,128)=384 -> no packing
    x2 = jax.nn.sigmoid(jax.random.normal(kx2, (N2, C2))).astype(jnp.bfloat16)
    y2 = (jax.random.uniform(ky2, (N2, C2)) > 0.5).astype(jnp.bfloat16)
    weight2 = jnp.linspace(0.25, 2.0, C2, dtype=jnp.float32)

    out2 = jax.block_until_ready(weighted_asymmetric_loss(x2, y2, weight2, row_tile=8))
    ref2 = _reference(x2, y2, weight2)
    assert jnp.allclose(out2, ref2, rtol=1e-5, atol=1e-5), (out2, ref2)

    # --- Test 3: no weight (weight=None path) ---
    out3 = jax.block_until_ready(weighted_asymmetric_loss(x, y, None))
    ref3 = _reference(x, y, jnp.ones((C,), jnp.float32))
    assert jnp.allclose(out3, ref3, rtol=1e-5, atol=1e-6), (out3, ref3)

    # --- Test 4: single-log hard-label fast path (y in {0,1}) ---
    out4 = jax.block_until_ready(weighted_asymmetric_loss(x, y, weight, hard_labels=True))
    assert jnp.allclose(out4, ref, rtol=1e-5, atol=1e-6), (out4, ref)

    # --- Test 5: packed + grouped (8, c_pack) accumulator + split + ragged tail ---
    N3, C3 = 130, 64  # packs to rows=65, c_pack=128; row_tile=16 -> 5 blocks
    x3 = jax.nn.sigmoid(jax.random.normal(kx3, (N3, C3), dtype=jnp.float32))
    y3 = (jax.random.uniform(ky3, (N3, C3)) > 0.5).astype(jnp.float32)
    weight3 = jnp.linspace(0.75, 1.25, C3, dtype=jnp.float32)

    out5 = jax.block_until_ready(weighted_asymmetric_loss(x3, y3, weight3, row_tile=16))
    ref5 = _reference(x3, y3, weight3)
    assert jnp.allclose(out5, ref5, rtol=1e-5, atol=1e-6), (out5, ref5)

    print("KERNEL_OK")
</pallas_src>

<mosaic_0001>
module attributes {stable_mosaic.version = 11 : i64} {
  func.func @_wal_kernel(%arg0: i32, %arg1: i32, %arg2: memref<2x128xf32, #tpu.memory_space<vmem>>, %arg3: memref<2x128xf32, #tpu.memory_space<vmem>>, %arg4: memref<1x1x128xf32, #tpu.memory_space<vmem>>) attributes {dimension_semantics = [#tpu.dimension_semantics<parallel>, #tpu.dimension_semantics<arbitrary>], iteration_bounds = array<i64: 1, 1>, scalar_prefetch = 0 : i64, scratch_operands = 0 : i64, tpu.core_type = #tpu.core_type<tc>, window_params = [{transform_indices = @transform_0, window_bounds = array<i64: 2, 128>}, {transform_indices = @transform_1, window_bounds = array<i64: 2, 128>}, {transform_indices = @transform_2, window_bounds = array<i64: 1, 1, 128>}]} {
    %c0_i32 = arith.constant 0 : i32
    %0 = arith.cmpi eq, %arg1, %c0_i32 : i32
    %1 = arith.extui %0 : i1 to i32
    %c0_i32_0 = arith.constant 0 : i32
    %2 = arith.cmpi ne, %1, %c0_i32_0 : i32
    scf.if %2 {
      %cst_14 = arith.constant 0.000000e+00 : f32
      %25 = vector.broadcast %cst_14 : f32 to vector<1x1x128xf32>
      %c0_15 = arith.constant 0 : index
      %c0_16 = arith.constant 0 : index
      %c0_17 = arith.constant 0 : index
      %26 = vector.load %arg4[%c0_15, %c0_16, %c0_17] : memref<1x1x128xf32, #tpu.memory_space<vmem>>, vector<1x1x128xf32>
      tpu.vector_store %arg4[%c0_15, %c0_16, %c0_17], %25 {strides = array<i32>} : memref<1x1x128xf32, #tpu.memory_space<vmem>>, vector<1x1x128xf32>,
    } else {
    }
    %c0 = arith.constant 0 : index
    %c0_1 = arith.constant 0 : index
    %3 = vector.load %arg2[%c0, %c0_1] : memref<2x128xf32, #tpu.memory_space<vmem>>, vector<2x128xf32>
    %c0_2 = arith.constant 0 : index
    %c0_3 = arith.constant 0 : index
    %4 = vector.load %arg3[%c0_2, %c0_3] : memref<2x128xf32, #tpu.memory_space<vmem>>, vector<2x128xf32>
    %cst = arith.constant 9.99999993E-9 : f32
    %5 = vector.broadcast %cst : f32 to vector<2x128xf32>
    %6 = arith.maximumf %3, %5 : vector<2x128xf32>
    %7 = math.log %6 : vector<2x128xf32>
    %8 = arith.mulf %4, %7 : vector<2x128xf32>
    %cst_4 = arith.constant 1.000000e+00 : f32
    %9 = vector.broadcast %cst_4 : f32 to vector<2x128xf32>
    %10 = arith.subf %9, %4 : vector<2x128xf32>
    %cst_5 = arith.constant 1.000000e+00 : f32
    %11 = vector.broadcast %cst_5 : f32 to vector<2x128xf32>
    %12 = arith.subf %11, %3 : vector<2x128xf32>
    %cst_6 = arith.constant 9.99999993E-9 : f32
    %13 = vector.broadcast %cst_6 : f32 to vector<2x128xf32>
    %14 = arith.maximumf %12, %13 : vector<2x128xf32>
    %15 = math.log %14 : vector<2x128xf32>
    %16 = arith.mulf %10, %15 : vector<2x128xf32>
    %17 = arith.mulf %3, %16 : vector<2x128xf32>
    %18 = arith.addf %8, %17 : vector<2x128xf32>
    %c0_7 = arith.constant 0 : index
    %c0_8 = arith.constant 0 : index
    %c0_9 = arith.constant 0 : index
    %19 = vector.load %arg4[%c0_7, %c0_8, %c0_9] : memref<1x1x128xf32, #tpu.memory_space<vmem>>, vector<1x1x128xf32>
    %cst_10 = arith.constant dense<0.000000e+00> : vector<128xf32>
    %20 = vector.multi_reduction <add>, %18, %cst_10 [0] : vector<2x128xf32> to vector<128xf32>
    %21 = vector.shape_cast %20 : vector<128xf32> to vector<1x128xf32>
    %22 = vector.shape_cast %21 : vector<1x128xf32> to vector<1x1x128xf32>
    %23 = arith.addf %19, %22 : vector<1x1x128xf32>
    %c0_11 = arith.constant 0 : index
    %c0_12 = arith.constant 0 : index
    %c0_13 = arith.constant 0 : index
    %24 = vector.load %arg4[%c0_11, %c0_12, %c0_13] : memref<1x1x128xf32, #tpu.memory_space<vmem>>, vector<1x1x128xf32>
    tpu.vector_store %arg4[%c0_11, %c0_12, %c0_13], %23 {strides = array<i32>} : memref<1x1x128xf32, #tpu.memory_space<vmem>>, vector<1x1x128xf32>,
    return
  }
  func.func @transform_0(%arg0: i32, %arg1: i32) -> (i32, i32) {
    %c1_i32 = arith.constant 1 : i32
    %0 = arith.muli %arg0, %c1_i32 : i32
    %1 = arith.addi %0, %arg1 : i32
    %c0_i32 = arith.constant 0 : i32
    %2 = arith.minsi %1, %c0_i32 : i32
    %c0_i32_0 = arith.constant 0 : i32
    %c0_i32_1 = arith.constant 0 : i32
    return %2, %c0_i32_0 : i32, i32
  }
  func.func @transform_1(%arg0: i32, %arg1: i32) -> (i32, i32) {
    %c1_i32 = arith.constant 1 : i32
    %0 = arith.muli %arg0, %c1_i32 : i32
    %1 = arith.addi %0, %arg1 : i32
    %c0_i32 = arith.constant 0 : i32
    %2 = arith.minsi %1, %c0_i32 : i32
    %c0_i32_0 = arith.constant 0 : i32
    %c0_i32_1 = arith.constant 0 : i32
    return %2, %c0_i32_0 : i32, i32
  }
  func.func @transform_2(%arg0: i32, %arg1: i32) -> (i32, i32, i32) {
    %c0_i32 = arith.constant 0 : i32
    %c0_i32_0 = arith.constant 0 : i32
    %c0_i32_1 = arith.constant 0 : i32
    return %arg0, %c0_i32, %c0_i32_0 : i32, i32, i32
  }
}

</mosaic_0001>

<llo_original>
// kernel: tpu_custom_call.1
$region0: #{tpu_custom_call.1}
  #allocation0 [shape = 'u32[]', space=smem, size = 0x4, offset = 0x4, fixed_abs, tag = 'smem constant byte address 0x4 - core index']
  #allocation1 [shape = 'u32[144,128]{1,0:T(1,128)}', space=vmem, size = 0x12000, scoped, tag = 'internal scratch']
  %s0 = inlined_call_operand.hbm [shape: f32[2,128], index: 0, kind: input, shape index: {}]
  %s1 = inlined_call_operand.hbm [shape: f32[2,128], index: 1, kind: input, shape index: {}]
  %s2 = inlined_call_operand.hbm [shape: f32[1,1,128], index: 2, kind: output, shape index: {}]
  %s3 = sld [smem:[#allocation0]]
  $region30: #{tpu_custom_call.1} parent=0
    _
  %s5 = ssub.s32 1, %s3
  %s6 = scalar_select 0, %s5, %s3
  $region1: #{tpu_custom_call.1} parent=0
    #allocation2 [shape = 'u8[1024]{0}', space=vmem, size = 0x400, scoped, tag = 'input window, operand 0, single buffered']
    #allocation3 [shape = 's32[1]{0}', space=sflag, size = 0x4, scoped, tag = 'scoped memory for tpu_custom_call.1']
    #allocation4 [shape = 's32[1]{0}', space=sflag, size = 0x4, scoped, tag = 'scoped memory for tpu_custom_call.1']
    #allocation5 [shape = 'u8[1024]{0}', space=vmem, size = 0x400, scoped, tag = 'input window, operand 1, single buffered']
    #allocation6 [shape = 's32[1]{0}', space=sflag, size = 0x4, scoped, tag = 'scoped memory for tpu_custom_call.1']
    #allocation7 [shape = 'u8[512]{0}', space=vmem, size = 0x400, scoped, tag = 'output window, operand 0, single buffered']
    %7 = vsyncpa [#allocation3], 0
    %8 = vsyncpa [#allocation6], 0
    %9 = vsyncpa [#allocation4], 0
    // Predicated region
    $region2: #{tpu_custom_call.1} parent=1 // pred_check
      _
    $region3: #{tpu_custom_call.1} parent=1 // pred_check_branch
      %11 = sbr.rel (0) target = $region5
    $region4: #{tpu_custom_call.1} parent=1 // pred_region
      %s12 = sadd.s32 0, 0
      %p13 = scmp.lt.s32.totalorder %s12, 0
      %s14 = scalar_select %p13, %s12, 0
      %s16 = ssub.s32 32, 32
      %17 = vsyncadd [#allocation3], %s16
      %s18 = smul.addr %s14, 32
      %s19 = scalar_lea.hbm %s0, %s18
      %s21 = sshll.u32 [#allocation2], 4
      %s22 = int_to_ptr.vmem [resolvable:$true] %s21
      %24 = dma.hbm_to_vmem [thread:$0]  %s19, 32, %s22, [#allocation3]
    $region5: #{tpu_custom_call.1} parent=1 // pred_fallthru
      _
    // Predicated region
    $region6: #{tpu_custom_call.1} parent=1 // pred_check
      _
    $region7: #{tpu_custom_call.1} parent=1 // pred_check_branch
      %26 = sbr.rel (0) target = $region9
    $region8: #{tpu_custom_call.1} parent=1 // pred_region
      %s27 = sadd.s32 0, 0
      %p28 = scmp.lt.s32.totalorder %s27, 0
      %s29 = scalar_select %p28, %s27, 0
      %s31 = ssub.s32 32, 32
      %32 = vsyncadd [#allocation6], %s31
      %s33 = smul.addr %s29, 32
      %s34 = scalar_lea.hbm %s1, %s33
      %s36 = sshll.u32 [#allocation5], 4
      %s37 = int_to_ptr.vmem [resolvable:$true] %s36
      %39 = dma.hbm_to_vmem [thread:$0]  %s34, 32, %s37, [#allocation6]
    $region9: #{tpu_custom_call.1} parent=1 // pred_fallthru
      _
    // Predicated region
    $region10: #{tpu_custom_call.1} parent=1 // pred_check
      _
    $region11: #{tpu_custom_call.1} parent=1 // pred_check_branch
      %41 = sbr.rel (0) target = $region13
    $region12: #{tpu_custom_call.1} parent=1 // pred_region
      %42 = dma.done [#allocation3], 32
    $region13: #{tpu_custom_call.1} parent=1 // pred_fallthru
      _
    // Predicated region
    $region14: #{tpu_custom_call.1} parent=1 // pred_check
      _
    $region15: #{tpu_custom_call.1} parent=1 // pred_check_branch
      %44 = sbr.rel (0) target = $region17
    $region16: #{tpu_custom_call.1} parent=1 // pred_region
      %45 = dma.done [#allocation6], 32
    $region17: #{tpu_custom_call.1} parent=1 // pred_fallthru
      _
    %s46 = sadd.s32 0, 0
    %p47 = scmp.lt.s32.totalorder %s46, 0
    %s48 = scalar_select %p47, %s46, 0
    %s49 = sadd.s32 0, 0
    %p50 = scmp.lt.s32.totalorder %s49, 0
    %s51 = scalar_select %p50, %s49, 0
    %p52 = scmp.eq.s32.totalorder 0, 0
    // Predicated region
    $region18: #{tpu_custom_call.1} parent=1 // pred_check
      %p53 = pneg %p52
    $region19: #{tpu_custom_call.1} parent=1 // pred_check_branch
      %55 = sbr.rel (%p53) target = $region21
    $region20: #{tpu_custom_call.1} parent=1 // pred_region
      %56 = vst [vmem:[#allocation7] sm:$0x1] 0.0
    $region21: #{tpu_custom_call.1} parent=1 // pred_fallthru
      _
    %v57 = vld [vmem:[#allocation2] sm:$0x3]
    %v58 = vld [vmem:[#allocation5] sm:$0x3]
    %v59 = vmax.f32 %v57, 1e-08
    %v60 = vlog2.pop %v59
    %v61 = vmul.f32 %v60, 0.6931472
    %v62 = vmul.f32 %v58, %v61
    %v63 = vsub.f32 1.0, %v58
    %v64 = vsub.f32 1.0, %v57
    %v65 = vmax.f32 %v64, 1e-08
    %v66 = vlog2.pop %v65
    %v67 = vmul.f32 %v66, 0.6931472
    %v68 = vmul.f32 %v63, %v67
    %v69 = vmul.f32 %v57, %v68
    %v70 = vadd.f32 %v62, %v69
    %v71 = vld [vmem:[#allocation7] sm:$0x1]
    %vm72 = vcmask 1041408
    %v73 = vsel %vm72, %v70, 0.0
    %v74 = vrot.slane %v73, 4
    %v75 = vadd.f32 %v73, %v74
    %v76 = vrot.slane %v75, 2
    %v77 = vadd.f32 %v75, %v76
    %v78 = vrot.slane %v77, 1
    %v79 = vadd.f32 %v77, %v78
    %v80 = vadd.f32 %v71, %v79
    %81 = vst [vmem:[#allocation7] sm:$0x1] %v80
    // Predicated region
    $region22: #{tpu_custom_call.1} parent=1 // pred_check
      _
    $region23: #{tpu_custom_call.1} parent=1 // pred_check_branch
      %83 = sbr.rel (0) target = $region25
    $region24: #{tpu_custom_call.1} parent=1 // pred_region
      %s85 = ssub.s32 16, 16
      %86 = vsyncadd [#allocation4], %s85
      %s88 = sshll.u32 [#allocation7], 4
      %s89 = int_to_ptr.vmem [resolvable:$true] %s88
      %91 = dma.vmem_to_hbm [thread:$0]  %s89, 16, %s2, [#allocation4]
    $region25: #{tpu_custom_call.1} parent=1 // pred_fallthru
      _
    // Predicated region
    $region26: #{tpu_custom_call.1} parent=1 // pred_check
      _
    $region27: #{tpu_custom_call.1} parent=1 // pred_check_branch
      %93 = sbr.rel (0) target = $region29
    $region28: #{tpu_custom_call.1} parent=1 // pred_region
      %94 = dma.done [#allocation4], 16
    $region29: #{tpu_custom_call.1} parent=1 // pred_fallthru
      _
    %95 = vsyncpa [#allocation3], 1
    %96 = vsyncpa [#allocation6], 1
    %97 = vsyncpa [#allocation4], 1

</llo_original>
